<compile_context>
chip_gen: v7x
topology: tpu7x:2x2x1
jax: 0.10.0
libtpu: 0.0.40
codegen_flags: <defaults>
</compile_context>

<pallas_src>
import functools

import jax
import jax.numpy as jnp
import numpy as np
from jax.experimental import pallas as pl
from jax.experimental.pallas import tpu as pltpu


def _round_up(x, m):
    return (x + m - 1) // m * m


def _time_embedding_kernel(t_ref, consts_ref, out_ref, *, block_n):
    # t_ref:      (n_pad, 1)      full timestep column, resident in VMEM
    # consts_ref: (2, model_dim)  row 0 = 1/i_matrix per column, row 1 = phase
    # out_ref:    (block_n, model_dim)
    start = pl.multiple_of(pl.program_id(0) * block_n, block_n)
    t = t_ref[pl.ds(start, block_n), :]            # (bn, 1) f32
    inv_div = consts_ref[0:1, :]                   # (1, D)
    phase = consts_ref[1:2, :]                     # (1, D)
    # even columns -> sin(t/i), odd columns -> cos(t/i) == sin(t/i + pi/2).
    # Single EUP transcendental per element, dense lane-aligned store.
    out_ref[...] = jnp.sin(t * inv_div + phase).astype(out_ref.dtype)


def time_embedding_layer(timesteps, *, model_dim, block_n=1024):
    """Pallas TPU implementation of TimeEmbeddingLayer.forward."""
    t = jnp.asarray(timesteps, jnp.float32).reshape(-1, 1)  # torch.reshape(timesteps, (-1, 1))
    n = t.shape[0]

    # --- host-side constants, exactly mirroring the torch code --------------
    # i_matrix = 10000 ** (arange(0, 2, model_dim) / model_dim)
    idx = np.arange(0, 2, model_dim, dtype=np.float64)       # typically just [0.]
    i_matrix = np.power(10000.0, idx / float(model_dim)).astype(np.float32)
    even_cols = (model_dim + 1) // 2                         # width of the 0::2 slice
    odd_cols = model_dim // 2                                # width of the 1::2 slice
    if i_matrix.shape[0] == 1:
        div_even = np.full((even_cols,), i_matrix[0], np.float32)
        div_odd = np.full((odd_cols,), i_matrix[0], np.float32)
    else:  # degenerate model_dim (<2); keep torch broadcast rules
        div_even = np.broadcast_to(i_matrix, (even_cols,)).astype(np.float32)
        div_odd = np.broadcast_to(i_matrix, (odd_cols,)).astype(np.float32)
    div = np.zeros((model_dim,), np.float32)
    div[0::2] = div_even
    div[1::2] = div_odd

    phase = np.zeros((model_dim,), np.float32)
    phase[1::2] = np.float32(np.pi / 2.0)                    # cos(x) = sin(x + pi/2)

    consts = jnp.asarray(
        np.stack([1.0 / div, phase], axis=0))                # (2, D) packed constant

    # --- row tiling ----------------------------------------------------------
    # Keep double-buffered output tile well under the v7x 32 MiB scoped default:
    # bn=1024, D=128 -> 0.5 MiB tile, 1 MiB double-buffered.
    bn = min(block_n, max(8, _round_up(n, 8)))                # multiple of 8
    n_pad = _round_up(n, bn)
    if n_pad != n:
        t = jnp.pad(t, ((0, n_pad - n), (0, 0)))

    out = pl.pallas_call(
        functools.partial(_time_embedding_kernel, block_n=bn),
        out_shape=jax.ShapeDtypeStruct((n_pad, model_dim), jnp.float32),
        grid=(n_pad // bn,),
        in_specs=[
            # Whole timestep column resident (constant block index => one DMA total).
            pl.BlockSpec((n_pad, 1), lambda i: (0, 0)),
            # Packed (1/i_matrix, phase) rows, resident.
            pl.BlockSpec((2, model_dim), lambda i: (0, 0)),
        ],
        out_specs=pl.BlockSpec((bn, model_dim), lambda i: (i, 0)),
        compiler_params=pltpu.CompilerParams(
            dimension_semantics=("parallel",)),
    )(t, consts)

    return out[:n]


def reference(timesteps, model_dim):
    """NumPy reference mirroring the PyTorch forward exactly."""
    t = np.asarray(timesteps, np.float32).reshape(-1, 1)
    idx = np.arange(0, 2, model_dim, dtype=np.float64)
    i_matrix = np.power(10000.0, idx / float(model_dim)).astype(np.float32).reshape(1, -1)
    table = np.zeros((t.shape[0], model_dim), np.float32)
    table[:, 0::2] = np.sin(t / i_matrix)
    table[:, 1::2] = np.cos(t / i_matrix)
    return table


if __name__ == "__main__":
    model_dim = 128      # lane-dense last dim (multiple of 128)
    n_timesteps = 8

    key = jax.random.PRNGKey(0)
    timesteps = jax.random.randint(key, (n_timesteps,), 0, 100).astype(jnp.float32)

    fwd = jax.jit(functools.partial(time_embedding_layer, model_dim=model_dim))
    out = fwd(timesteps)
    jax.block_until_ready(out)

    ref = reference(np.asarray(timesteps), model_dim)
    assert out.shape == (n_timesteps, model_dim)
    np.testing.assert_allclose(np.asarray(out), ref, rtol=1e-3, atol=1e-3)
    print("KERNEL_OK")
</pallas_src>

<mosaic_0001>
module attributes {stable_mosaic.version = 11 : i64} {
  func.func @_time_embedding_kernel(%arg0: i32, %arg1: memref<8x1xf32, #tpu.memory_space<vmem>>, %arg2: memref<2x128xf32, #tpu.memory_space<vmem>>, %arg3: memref<8x128xf32, #tpu.memory_space<vmem>>) attributes {dimension_semantics = [#tpu.dimension_semantics<parallel>], iteration_bounds = array<i64: 1>, scalar_prefetch = 0 : i64, scratch_operands = 0 : i64, tpu.core_type = #tpu.core_type<tc>, window_params = [{pipeline_mode = #tpu.pipeline_mode<synchronous>, transform_indices = @transform_0, window_bounds = array<i64: 8, 1>}, {pipeline_mode = #tpu.pipeline_mode<synchronous>, transform_indices = @transform_1, window_bounds = array<i64: 2, 128>}, {transform_indices = @transform_2, window_bounds = array<i64: 8, 128>}]} {
    %c8_i32 = arith.constant 8 : i32
    %0 = arith.muli %arg0, %c8_i32 : i32
    %1 = tpu.assume_multiple %0, 8 : i32
    %2 = arith.index_cast %1 : i32 to index
    %c0 = arith.constant 0 : index
    %3 = vector.load %arg1[%2, %c0] : memref<8x1xf32, #tpu.memory_space<vmem>>, vector<8x1xf32>
    %c0_0 = arith.constant 0 : index
    %c0_1 = arith.constant 0 : index
    %4 = vector.load %arg2[%c0_0, %c0_1] : memref<2x128xf32, #tpu.memory_space<vmem>>, vector<1x128xf32>
    %c1 = arith.constant 1 : index
    %c0_2 = arith.constant 0 : index
    %5 = vector.load %arg2[%c1, %c0_2] : memref<2x128xf32, #tpu.memory_space<vmem>>, vector<1x128xf32>
    %6 = vector.broadcast %3 : vector<8x1xf32> to vector<8x128xf32>
    %7 = vector.broadcast %4 : vector<1x128xf32> to vector<8x128xf32>
    %8 = arith.mulf %6, %7 : vector<8x128xf32>
    %9 = vector.broadcast %5 : vector<1x128xf32> to vector<8x128xf32>
    %10 = arith.addf %8, %9 : vector<8x128xf32>
    %11 = math.sin %10 : vector<8x128xf32>
    %c0_3 = arith.constant 0 : index
    %c0_4 = arith.constant 0 : index
    %12 = vector.load %arg3[%c0_3, %c0_4] : memref<8x128xf32, #tpu.memory_space<vmem>>, vector<8x128xf32>
    tpu.vector_store %arg3[%c0_3, %c0_4], %11 {strides = array<i32>} : memref<8x128xf32, #tpu.memory_space<vmem>>, vector<8x128xf32>,
    return
  }
  func.func @transform_0(%arg0: i32) -> (i32, i32) {
    %c0_i32 = arith.constant 0 : i32
    %c0_i32_0 = arith.constant 0 : i32
    %c0_i32_1 = arith.constant 0 : i32
    return %c0_i32, %c0_i32_0 : i32, i32
  }
  func.func @transform_1(%arg0: i32) -> (i32, i32) {
    %c0_i32 = arith.constant 0 : i32
    %c0_i32_0 = arith.constant 0 : i32
    %c0_i32_1 = arith.constant 0 : i32
    return %c0_i32, %c0_i32_0 : i32, i32
  }
  func.func @transform_2(%arg0: i32) -> (i32, i32) {
    %c0_i32 = arith.constant 0 : i32
    %c0_i32_0 = arith.constant 0 : i32
    return %arg0, %c0_i32 : i32, i32
  }
}

</mosaic_0001>

<llo_original>
// kernel: time_embedding_layer.1
$region0: #{time_embedding_layer.1}
  #allocation0 [shape = 'u32[]', space=smem, size = 0x4, offset = 0x4, fixed_abs, tag = 'smem constant byte address 0x4 - core index']
  #allocation1 [shape = 'u32[144,128]{1,0:T(1,128)}', space=vmem, size = 0x12000, scoped, tag = 'internal scratch']
  %s0 = inlined_call_operand.vmem [shape: f32[8,1], index: 0, kind: input, shape index: {}]
  %s1 = inlined_call_operand.vmem [shape: f32[2,128], index: 1, kind: input, shape index: {}]
  %s2 = inlined_call_operand.hbm [shape: f32[8,128], index: 2, kind: output, shape index: {}]
  %s3 = sld [smem:[#allocation0]]
  $region18: #{time_embedding_layer.1} parent=0
    _
  %s5 = ssub.s32 1, %s3
  %s6 = scalar_select 0, %s5, %s3
  $region1: #{time_embedding_layer.1} parent=0
    #allocation2 [shape = 'u8[4096]{0}', space=vmem, size = 0x1000, scoped, tag = 'output window, operand 0, single buffered']
    #allocation3 [shape = 's32[1]{0}', space=sflag, size = 0x4, scoped, tag = 'scoped memory for time_embedding_layer.1']
    %7 = vsyncpa [#allocation3], 0
    // Predicated region
    $region2: #{time_embedding_layer.1} parent=1 // pred_check
      _
    $region3: #{time_embedding_layer.1} parent=1 // pred_check_branch
      %9 = sbr.rel (0) target = $region5
    $region4: #{time_embedding_layer.1} parent=1 // pred_region
      _
    $region5: #{time_embedding_layer.1} parent=1 // pred_fallthru
      _
    // Predicated region
    $region6: #{time_embedding_layer.1} parent=1 // pred_check
      _
    $region7: #{time_embedding_layer.1} parent=1 // pred_check_branch
      %11 = sbr.rel (0) target = $region9
    $region8: #{time_embedding_layer.1} parent=1 // pred_region
      _
    $region9: #{time_embedding_layer.1} parent=1 // pred_fallthru
      _
    %s12 = smul.u32 0, 8
    %s13 = scalar_lea.vmem %s0, %s12
    %v14 = vld [vmem:[%s13] sm:$0xff]
    %v15 = vld [vmem:[%s1] sm:$0x1]
    %v16 = vld [vmem:[%s1 + $0x1] sm:$0x1]
    %18 = vset.pattern.permute.xlu0 0
    %19 = vperm.xlu0 %18, %v14
    %v20 = vpop.permute.xlu0 %19
    %v22 = vlaneseq
    %v23 = vshrl.u32 %v22, 7
    %v24 = vsub.s32 0, %v23
    %v25 = vrot.slane %v15, %v24
    %v26 = vmul.f32 %v20, %v25
    %v27 = vlaneseq
    %v28 = vshrl.u32 %v27, 7
    %v29 = vsub.s32 0, %v28
    %v30 = vrot.slane %v16, %v29
    %v31 = vadd.f32 %v26, %v30
    %v32 = vand.u32 2147483647, %v31
    %vm33 = vcmp.le.f32.partialorder %v32, 0.7853982
    %vm34 = vcmp.lt.s32.totalorder %v31, 0
    %v35 = vand.u32 %v31, 2139095040
    %v36 = vshrl.u32 %v35, 23
    %v37 = vsub.s32 %v36, 127
    %v38 = vand.u32 2147483647, %v31
    %v39 = vand.u32 %v38, 8388607
    %v40 = vor.u32 %v39, 8388608
    %v41 = vsub.s32 0, %v40
    %v42 = vadd.s32 %v37, 1
    %vm43 = vcmp.gt.s32.totalorder %v42, 0
    %v44 = vsel %vm43, %v42, 0
    %v45 = vshrl.u32 %v44, 5
    %v46 = vand.u32 %v44, 31
    %v47 = vsub.s32 32, %v46
    %v48 = vshrl.u32 683565275, %v47
    %v49 = vshll.u32 683565275, %v46
    %v50 = vshrl.u32 2475754826, %v47
    %v51 = vor.u32 %v49, %v50
    %v52 = vshll.u32 2475754826, %v46
    %v53 = vshrl.u32 2131351028, %v47
    %v54 = vor.u32 %v52, %v53
    %v55 = vshll.u32 2131351028, %v46
    %v56 = vshrl.u32 2102212464, %v47
    %v57 = vor.u32 %v55, %v56
    %v58 = vshll.u32 2102212464, %v46
    %v59 = vshrl.u32 920167782, %v47
    %v60 = vor.u32 %v58, %v59
    %v61 = vshll.u32 920167782, %v46
    %v62 = vshrl.u32 1326507024, %v47
    %v63 = vor.u32 %v61, %v62
    %vm64 = vcmp.lt.s32.totalorder %v45, 1
    %vm65 = vcmp.lt.s32.totalorder %v45, 2
    %vm66 = vcmp.lt.s32.totalorder %v45, 3
    %vm67 = vcmp.lt.s32.totalorder %v45, 4
    %v68 = vsel %vm64, %v48, %v51
    %v69 = vsel %vm67, %v57, 2102212464
    %v70 = vsel %vm66, %v54, %v69
    %v71 = vsel %vm65, %v68, %v70
    %v72 = vsel %vm64, %v51, %v54
    %v73 = vsel %vm67, %v60, 920167782
    %v74 = vsel %vm66, %v57, %v73
    %v75 = vsel %vm65, %v72, %v74
    %v76 = vsel %vm64, %v54, %v57
    %v77 = vsel %vm67, %v63, 1326507024
    %v78 = vsel %vm66, %v60, %v77
    %v79 = vsel %vm65, %v76, %v78
    %v80 = vshll.u32 %v40, 8
    %v81 = vmul.u32.u64.compose %v80, %v79
    %v82 = vextract.low.u32 %v81
    %v83 = vextract.high.u32 %v81
    %v84 = vmul.u32.u64.compose %v80, %v75
    %v85 = vextract.low.u32 %v84
    %v86 = vextract.high.u32 %v84
    %v87 = vmul.u32 %v80, %v71
    %v88 = vadd.s32 %v83, %v85
    %vm89 = vc.u32 %v83, %v85
    %v90 = vadd.s32 %v86, 1
    %v91 = vsel %vm89, %v90, %v86
    %v92 = vadd.s32 %v87, %v91
    %v93 = vadd.s32 %v92, 536870912
    %v94 = vshrl.u32 %v93, 30
    %v95 = vshll.u32 %v94, 30
    %v96 = vsub.s32 %v92, %v95
    %vm97 = vcmp.lt.s32.totalorder %v96, 0
    %v98 = vsub.s32 0, %v96
    %v99 = vsel %vm97, %v98, %v96
    %v100 = vclz %v99
    %v101 = vsub.s32 %v100, 2
    %vm102 = vcmp.gt.s32.totalorder 0, %v101
    %v103 = vsel %vm102, 0, %v101
    %v104 = vsub.s32 32, %v103
    %v105 = vshll.u32 %v96, %v103
    %v106 = vshrl.u32 %v88, %v104
    %v107 = vor.u32 %v105, %v106
    %v108 = vsub.s32 4294967266, %v103
    %v109 = vadd.s32 %v108, 127
    %v110 = vshll.u32 %v109, 23
    %v111 = vor.u32 4788187, %v110
    %v112 = vand.u32 2147483647, %v111
    %v114 = vcvt.s32.f32 %v107
    %v115 = vmul.f32 %v114, %v112
    %v116 = vxor.u32 %v115, 2147483648
    %v117 = vsel %vm34, %v116, %v115
    %v118 = vsub.s32 4, %v94
    %v119 = vsel %vm34, %v118, %v94
    %v120 = vsel %vm33, %v31, %v117
    %v121 = vsel %vm33, 0, %v119
    %v122 = vcosq.f32.pop %v120
    %v123 = vsinq.f32.pop %v120
    %vm124 = vweird.f32 %v31
    %v125 = vadd.s32 %v121, 3
    %v126 = vand.u32 %v125, 3
    %vm127 = vcmp.lt.s32.totalorder %v126, 2
    %vm128 = vcmp.eq.s32.totalorder %v126, 0
    %v129 = vxor.u32 %v123, 2147483648
    %v130 = vsel %vm128, %v122, %v129
    %vm131 = vcmp.eq.s32.totalorder %v126, 2
    %v132 = vxor.u32 %v122, 2147483648
    %v133 = vsel %vm131, %v132, %v123
    %v134 = vsel %vm127, %v130, %v133
    %v135 = vsel %vm124, nan, %v134
    %136 = vst [vmem:[#allocation2] sm:$0xff] %v135
    // Predicated region
    $region10: #{time_embedding_layer.1} parent=1 // pred_check
      _
    $region11: #{time_embedding_layer.1} parent=1 // pred_check_branch
      %138 = sbr.rel (0) target = $region13
    $region12: #{time_embedding_layer.1} parent=1 // pred_region
      %s140 = ssub.s32 128, 128
      %141 = vsyncadd [#allocation3], %s140
      %s143 = sshll.u32 [#allocation2], 4
      %s144 = int_to_ptr.vmem [resolvable:$true] %s143
      %146 = dma.vmem_to_hbm [thread:$0]  %s144, 128, %s2, [#allocation3]
    $region13: #{time_embedding_layer.1} parent=1 // pred_fallthru
      _
    // Predicated region
    $region14: #{time_embedding_layer.1} parent=1 // pred_check
      _
    $region15: #{time_embedding_layer.1} parent=1 // pred_check_branch
      %148 = sbr.rel (0) target = $region17
    $region16: #{time_embedding_layer.1} parent=1 // pred_region
      %149 = dma.done [#allocation3], 128
    $region17: #{time_embedding_layer.1} parent=1 // pred_fallthru
      _
    %150 = vsyncpa [#allocation3], 1

</llo_original>
